<compile_context>
chip_gen: v7x
topology: tpu7x:2x2x1
jax: 0.10.0
libtpu: 0.0.40
codegen_flags: <defaults>
</compile_context>

<pallas_src>
import functools
import math

import jax
import jax.numpy as jnp
from jax.experimental import pallas as pl
from jax.experimental.pallas import tpu as pltpu


def _ln_fold_kernel(x_ref, w_ref, seg_ref, o_ref, *, c):
    """Folded layout: each kernel row holds g = L // c original rows back-to-back.

    x_ref  : (row_tile, L) input, L = g*c with L % 128 == 0 (lane-dense)
    w_ref  : (1, L) f32, weight tiled g times
    seg_ref: (L, L) bf16 block-diagonal 0/1 matrix (ones within each c-segment)
    o_ref  : (row_tile, L)
    """
    x = x_ref[...].astype(jnp.float32)
    w = w_ref[...]
    seg = seg_ref[...]
    inv_c = jnp.float32(1.0 / c)

    def seg_mean(v):
        # Per-segment mean of v, already broadcast back to every lane of the
        # segment: (v @ A) * (1/c), A = 0/1 block-diagonal (exact in bf16).
        # Manual hi/lo bf16 split of v keeps ~f32 accuracy (residual ~2^-18)
        # using only standard bf16 MXU matmuls; the MXU is otherwise idle here
        # so this stays hidden under the HBM stream.
        hi = v.astype(jnp.bfloat16)
        lo = (v - hi.astype(jnp.float32)).astype(jnp.bfloat16)
        s = jnp.dot(hi, seg, preferred_element_type=jnp.float32)
        s = s + jnp.dot(lo, seg, preferred_element_type=jnp.float32)
        return s * inv_c

    mu = seg_mean(x)                       # two-pass: subtract mean first,
    xc = x - mu                            # avoids E[x^2]-mu^2 cancellation
    var = seg_mean(xc * xc)
    inv = jax.lax.rsqrt(var + jnp.float32(1e-5))
    # NOTE: output uses x (not xc): BiasFree_LayerNorm does NOT mean-center
    # the output, it only divides by the (mean-subtracted) std.
    o_ref[...] = (x * inv * w).astype(o_ref.dtype)


def _ln_plain_kernel(x_ref, w_ref, o_ref, *, c):
    """Unfolded fallback: one original row per kernel row (lanes masked if c < 128)."""
    x = x_ref[...].astype(jnp.float32)
    w = w_ref[...]
    inv_c = jnp.float32(1.0 / c)
    mu = jnp.sum(x, axis=-1, keepdims=True) * inv_c
    xc = x - mu
    var = jnp.sum(xc * xc, axis=-1, keepdims=True) * inv_c
    inv = jax.lax.rsqrt(var + jnp.float32(1e-5))
    o_ref[...] = (x * inv * w).astype(o_ref.dtype)


def _choose_row_tile(rows, lane_len, *, target_block_bytes=2 << 20, min_grid=8):
    """Pick a row tile (multiple of 8) for a (rows, lane_len) array.

    Budget by the lane-PADDED f32 working footprint (lanes round up to 128 and
    all intermediates are f32), which fixes the previous under-counting for
    C < 128. Targets ~2 MiB per block and keeps >= min_grid grid steps when
    there is enough work so dimension_semantics=("parallel",) can shard the
    grid across v7x's two TensorCores.
    """
    padded_lanes = ((lane_len + 127) // 128) * 128
    bytes_per_row = padded_lanes * 4                      # f32 working set
    t = max(8, (target_block_bytes // bytes_per_row) // 8 * 8)
    rows_up = ((rows + 7) // 8) * 8                       # never bigger than all rows
    t = min(t, rows_up)
    cap = max(8, (pl.cdiv(rows, min_grid) + 7) // 8 * 8)
    return int(min(t, cap))


def biasfree_layernorm(x, weight, *, row_tile=None):
    """x: (..., C), weight: (C,). Returns the same shape/dtype as x."""
    orig_shape = x.shape
    C = int(orig_shape[-1])
    assert weight.shape == (C,)
    rows = int(math.prod(orig_shape[:-1])) if len(orig_shape) > 1 else 1
    x2 = x.reshape(rows, C)
    w32 = weight.astype(jnp.float32)
    vmem_limit = 32 * 1024 * 1024        # 4 pipeline buffers + temporaries << 32 MiB

    g = 128 // math.gcd(C, 128)          # smallest g with (g*C) % 128 == 0
    L = g * C
    fold = (g > 1) and (L <= 512) and (rows >= g) and (rows % g == 0)

    compiler_params = pltpu.CompilerParams(
        dimension_semantics=("parallel",),
        vmem_limit_bytes=vmem_limit,
    )

    if fold:
        rows_f = rows // g
        xf = x2.reshape(rows_f, L)                       # contiguous -> metadata only
        rt = _choose_row_tile(rows_f, L) if row_tile is None else row_tile
        rt = max(8, (rt // 8) * 8)
        wf = jnp.tile(w32, (g,)).reshape(1, L)
        ids = jnp.arange(L, dtype=jnp.int32) // C
        seg_mat = (ids[:, None] == ids[None, :]).astype(jnp.bfloat16)   # (L, L)
        grid = (pl.cdiv(rows_f, rt),)
        # Partial last block: OOB rows of the input buffer hold stale data, but
        # every row's reduction is independent and OOB output rows are masked
        # on store (documented Pallas behavior) -- exercised in __main__.
        out = pl.pallas_call(
            functools.partial(_ln_fold_kernel, c=C),
            out_shape=jax.ShapeDtypeStruct((rows_f, L), x.dtype),
            grid_spec=pltpu.PrefetchScalarGridSpec(
                num_scalar_prefetch=0,
                grid=grid,
                in_specs=[
                    pl.BlockSpec((rt, L), lambda i: (i, 0)),
                    pl.BlockSpec((1, L), lambda i: (0, 0)),     # resident weight
                    pl.BlockSpec((L, L), lambda i: (0, 0)),     # resident segment matrix
                ],
                out_specs=pl.BlockSpec((rt, L), lambda i: (i, 0)),
            ),
            compiler_params=compiler_params,
        )(xf, wf, seg_mat)
        return out.reshape(orig_shape)

    # Fallback: C already a multiple of 128 (lane-dense anyway), or the fold
    # factor does not divide the row count (lanes masked if C % 128 != 0).
    rt = _choose_row_tile(rows, C) if row_tile is None else row_tile
    rt = max(8, (rt // 8) * 8)
    w2 = w32.reshape(1, C)
    grid = (pl.cdiv(rows, rt),)
    out = pl.pallas_call(
        functools.partial(_ln_plain_kernel, c=C),
        out_shape=jax.ShapeDtypeStruct((rows, C), x.dtype),
        grid_spec=pltpu.PrefetchScalarGridSpec(
            num_scalar_prefetch=0,
            grid=grid,
            in_specs=[
                pl.BlockSpec((rt, C), lambda i: (i, 0)),
                pl.BlockSpec((1, C), lambda i: (0, 0)),
            ],
            out_specs=pl.BlockSpec((rt, C), lambda i: (i, 0)),
        ),
        compiler_params=compiler_params,
    )(x2, w2)
    return out.reshape(orig_shape)


def _reference(x, weight):
    xf = x.astype(jnp.float32)
    var = jnp.var(xf, axis=-1, keepdims=True)            # unbiased=False (default)
    return (xf / jnp.sqrt(var + 1e-5) * weight.astype(jnp.float32)).astype(x.dtype)


if __name__ == "__main__":
    key = jax.random.PRNGKey(0)
    k1, k2, k3, k4, kw = jax.random.split(key, 5)

    # Case 1: C=48 (Restormer stage width) -> folded path (g=8, L=384),
    # non-trivial mean/scale, partial last row block (rows_f=25, rt=8).
    B, N, C = 2, 100, 48
    x = jax.random.normal(k1, (B, N, C), dtype=jnp.float32) * 2.0 + 1.0
    w = jax.random.uniform(kw, (C,), dtype=jnp.float32, minval=0.5, maxval=1.5)
    out = jax.block_until_ready(biasfree_layernorm(x, w, row_tile=8))
    ref = _reference(x, w)
    assert out.shape == x.shape and out.dtype == x.dtype
    assert jnp.allclose(out, ref, atol=5e-5, rtol=5e-5)

    # Case 2: C=32 -> folded path (g=4, L=128), auto row tile, module-default
    # weight = ones.
    B2, N2, C2 = 2, 64, 32
    x2 = jax.random.normal(k2, (B2, N2, C2), dtype=jnp.float32)
    w2 = jnp.ones((C2,), dtype=jnp.float32)
    out2 = jax.block_until_ready(biasfree_layernorm(x2, w2))
    ref2 = _reference(x2, w2)
    assert jnp.allclose(out2, ref2, atol=5e-5, rtol=5e-5)

    # Case 3: rows (=26) not divisible by the fold factor -> unfolded fallback
    # with masked lanes and a partial last block.
    B3, N3, C3 = 2, 13, 48
    x3 = jax.random.normal(k3, (B3, N3, C3), dtype=jnp.float32) * 3.0 + 0.5
    w3 = jnp.ones((C3,), dtype=jnp.float32)
    out3 = jax.block_until_ready(biasfree_layernorm(x3, w3, row_tile=8))
    ref3 = _reference(x3, w3)
    assert jnp.allclose(out3, ref3, atol=5e-5, rtol=5e-5)

    # Case 4: bf16 input, C=96 -> folded path (g=4, L=384); checks dtype
    # handling (tolerance is 1 bf16 ulp since both paths round at the end).
    B4, N4, C4 = 2, 64, 96
    x4 = (jax.random.normal(k4, (B4, N4, C4), dtype=jnp.float32)).astype(jnp.bfloat16)
    w4 = jnp.ones((C4,), dtype=jnp.float32)
    out4 = jax.block_until_ready(biasfree_layernorm(x4, w4))
    ref4 = _reference(x4, w4)
    assert out4.dtype == jnp.bfloat16
    assert jnp.allclose(out4.astype(jnp.float32), ref4.astype(jnp.float32),
                        atol=1e-2, rtol=1e-2)

    print("KERNEL_OK")
</pallas_src>

<mosaic_0001>
module attributes {stable_mosaic.version = 11 : i64} {
  func.func @_ln_fold_kernel(%arg0: i32, %arg1: memref<8x384xf32, #tpu.memory_space<vmem>>, %arg2: memref<1x384xf32, #tpu.memory_space<vmem>>, %arg3: memref<384x384xbf16, #tpu.memory_space<vmem>>, %arg4: memref<8x384xf32, #tpu.memory_space<vmem>>) attributes {dimension_semantics = [#tpu.dimension_semantics<parallel>], iteration_bounds = array<i64: 4>, scalar_prefetch = 0 : i64, scratch_operands = 0 : i64, tpu.core_type = #tpu.core_type<tc>, window_params = [{transform_indices = @transform_0, window_bounds = array<i64: 8, 384>}, {pipeline_mode = #tpu.pipeline_mode<synchronous>, transform_indices = @transform_1, window_bounds = array<i64: 1, 384>}, {pipeline_mode = #tpu.pipeline_mode<synchronous>, transform_indices = @transform_2, window_bounds = array<i64: 384, 384>}, {transform_indices = @transform_3, window_bounds = array<i64: 8, 384>}]} {
    %c0 = arith.constant 0 : index
    %c0_0 = arith.constant 0 : index
    %0 = vector.load %arg1[%c0, %c0_0] : memref<8x384xf32, #tpu.memory_space<vmem>>, vector<8x384xf32>
    %c0_1 = arith.constant 0 : index
    %c0_2 = arith.constant 0 : index
    %1 = vector.load %arg2[%c0_1, %c0_2] : memref<1x384xf32, #tpu.memory_space<vmem>>, vector<1x384xf32>
    %c0_3 = arith.constant 0 : index
    %c0_4 = arith.constant 0 : index
    %2 = vector.load %arg3[%c0_3, %c0_4] : memref<384x384xbf16, #tpu.memory_space<vmem>>, vector<384x384xbf16>
    %3 = arith.truncf %0 : vector<8x384xf32> to vector<8x384xbf16>
    %4 = arith.extf %3 : vector<8x384xbf16> to vector<8x384xf32>
    %5 = arith.subf %0, %4 : vector<8x384xf32>
    %6 = arith.truncf %5 : vector<8x384xf32> to vector<8x384xbf16>
    %cst = arith.constant dense<0.000000e+00> : vector<8x384xf32>
    %7 = tpu.matmul %3, %2, %cst {dimension_numbers = #tpu.dot_dimension_numbers<[1], [0], [0], [1], [0, 0, 1, 1], [], []>} : vector<8x384xbf16>, vector<384x384xbf16>, vector<8x384xf32> -> vector<8x384xf32>
    %cst_5 = arith.constant dense<0.000000e+00> : vector<8x384xf32>
    %8 = tpu.matmul %6, %2, %cst_5 {dimension_numbers = #tpu.dot_dimension_numbers<[1], [0], [0], [1], [0, 0, 1, 1], [], []>} : vector<8x384xbf16>, vector<384x384xbf16>, vector<8x384xf32> -> vector<8x384xf32>
    %9 = arith.addf %7, %8 : vector<8x384xf32>
    %cst_6 = arith.constant 0.020833334 : f32
    %10 = vector.broadcast %cst_6 : f32 to vector<8x384xf32>
    %11 = arith.mulf %9, %10 : vector<8x384xf32>
    %12 = arith.subf %0, %11 : vector<8x384xf32>
    %13 = arith.mulf %12, %12 : vector<8x384xf32>
    %14 = arith.truncf %13 : vector<8x384xf32> to vector<8x384xbf16>
    %15 = arith.extf %14 : vector<8x384xbf16> to vector<8x384xf32>
    %16 = arith.subf %13, %15 : vector<8x384xf32>
    %17 = arith.truncf %16 : vector<8x384xf32> to vector<8x384xbf16>
    %cst_7 = arith.constant dense<0.000000e+00> : vector<8x384xf32>
    %18 = tpu.matmul %14, %2, %cst_7 {dimension_numbers = #tpu.dot_dimension_numbers<[1], [0], [0], [1], [0, 0, 1, 1], [], []>} : vector<8x384xbf16>, vector<384x384xbf16>, vector<8x384xf32> -> vector<8x384xf32>
    %cst_8 = arith.constant dense<0.000000e+00> : vector<8x384xf32>
    %19 = tpu.matmul %17, %2, %cst_8 {dimension_numbers = #tpu.dot_dimension_numbers<[1], [0], [0], [1], [0, 0, 1, 1], [], []>} : vector<8x384xbf16>, vector<384x384xbf16>, vector<8x384xf32> -> vector<8x384xf32>
    %20 = arith.addf %18, %19 : vector<8x384xf32>
    %cst_9 = arith.constant 0.020833334 : f32
    %21 = vector.broadcast %cst_9 : f32 to vector<8x384xf32>
    %22 = arith.mulf %20, %21 : vector<8x384xf32>
    %cst_10 = arith.constant 9.99999974E-6 : f32
    %23 = vector.broadcast %cst_10 : f32 to vector<8x384xf32>
    %24 = arith.addf %22, %23 : vector<8x384xf32>
    %25 = math.rsqrt %24 : vector<8x384xf32>
    %26 = arith.mulf %0, %25 : vector<8x384xf32>
    %27 = vector.broadcast %1 : vector<1x384xf32> to vector<8x384xf32>
    %28 = arith.mulf %26, %27 : vector<8x384xf32>
    %c0_11 = arith.constant 0 : index
    %c0_12 = arith.constant 0 : index
    %29 = vector.load %arg4[%c0_11, %c0_12] : memref<8x384xf32, #tpu.memory_space<vmem>>, vector<8x384xf32>
    tpu.vector_store %arg4[%c0_11, %c0_12], %28 {strides = array<i32>} : memref<8x384xf32, #tpu.memory_space<vmem>>, vector<8x384xf32>,
    return
  }
  func.func @transform_0(%arg0: i32) -> (i32, i32) {
    %c0_i32 = arith.constant 0 : i32
    %c0_i32_0 = arith.constant 0 : i32
    return %arg0, %c0_i32 : i32, i32
  }
  func.func @transform_1(%arg0: i32) -> (i32, i32) {
    %c0_i32 = arith.constant 0 : i32
    %c0_i32_0 = arith.constant 0 : i32
    %c0_i32_1 = arith.constant 0 : i32
    return %c0_i32, %c0_i32_0 : i32, i32
  }
  func.func @transform_2(%arg0: i32) -> (i32, i32) {
    %c0_i32 = arith.constant 0 : i32
    %c0_i32_0 = arith.constant 0 : i32
    %c0_i32_1 = arith.constant 0 : i32
    return %c0_i32, %c0_i32_0 : i32, i32
  }
  func.func @transform_3(%arg0: i32) -> (i32, i32) {
    %c0_i32 = arith.constant 0 : i32
    %c0_i32_0 = arith.constant 0 : i32
    return %arg0, %c0_i32 : i32, i32
  }
}

</mosaic_0001>

<llo_original>
// kernel: tpu_custom_call.1
$region0: #{tpu_custom_call.1}
  #allocation0 [shape = 'u32[]', space=smem, size = 0x4, offset = 0x4, fixed_abs, tag = 'smem constant byte address 0x4 - core index']
  #allocation1 [shape = 'u32[144,128]{1,0:T(1,128)}', space=vmem, size = 0x12000, scoped, tag = 'internal scratch']
  %s0 = inlined_call_operand.hbm [shape: f32[25,384], index: 0, kind: input, shape index: {}]
  %s1 = inlined_call_operand.vmem [shape: f32[1,384], index: 1, kind: input, shape index: {}]
  %s2 = inlined_call_operand.hbm [shape: bf16[384,384], index: 2, kind: input, shape index: {}]
  %s3 = inlined_call_operand.hbm [shape: f32[25,384], index: 3, kind: output, shape index: {}]
  %s4 = sld [smem:[#allocation0]]
  $region53: #{tpu_custom_call.1} parent=0
    _
  %s6 = ssub.s32 1, %s4
  %s7 = scalar_select 0, %s6, %s4
  $region1: #{tpu_custom_call.1} parent=0
    #allocation2 [shape = 'u8[24576]{0}', space=vmem, size = 0x6000, scoped, tag = 'input window, operand 0']
    #allocation3 [shape = 's32[2]{0}', space=sflag, size = 0x8, scoped, tag = 'scoped memory for tpu_custom_call.1']
    #allocation4 [shape = 's32[2]{0}', space=sflag, size = 0x8, scoped, tag = 'scoped memory for tpu_custom_call.1']
    #allocation5 [shape = 'u8[294912]{0}', space=vmem, size = 0x48000, scoped, tag = 'input window, operand 2, single buffered']
    #allocation6 [shape = 's32[1]{0}', space=sflag, size = 0x4, scoped, tag = 'scoped memory for tpu_custom_call.1']
    #allocation7 [shape = 'u8[24576]{0}', space=vmem, size = 0x6000, scoped, tag = 'output window, operand 0']
    %8 = vsyncpa [#allocation3], 0
    %s9 = scalar_lea.sflag [#allocation3], 1
    %10 = vsyncpa %s9, 0
    %11 = vsyncpa [#allocation6], 0
    %12 = vsyncpa [#allocation4], 0
    %s13 = scalar_lea.sflag [#allocation4], 1
    %14 = vsyncpa %s13, 0
    loop: start=0, step=1, limit=6
    $region2: #{tpu_custom_call.1} parent=1 // loop_pre_header
      _
    $region3: #{tpu_custom_call.1} parent=1 // loop_header
      %s16 = sphi 0, %s20
      %p17 = scmp.ge.s32.totalorder %s16, 6
      %s26 = sphi 0, %s28
      %s29 = sphi 0, %s26
      %s30 = sphi 0, %s29
      %s46 = sphi 0, %s30
      %s50 = sphi 0, %s50
      %s52 = sphi 0, %s50
      %s53 = sphi 0, %s52
      %s67 = sphi 0, %s53
      %s71 = sphi 0, %s71
      %s73 = sphi 0, %s71
      %s74 = sphi 0, %s73
      %s88 = sphi 0, %s74
      %s94 = sphi 0, %s96
      %s97 = sphi 0, %s94
      %s98 = sphi 0, %s97
      %s114 = sphi 0, %s98
    $region4: #{tpu_custom_call.1} parent=1 // loop_header_branch
      %19 = sbr.rel (%p17) target = $region8
    $region5: #{tpu_custom_call.1} parent=1 // loop_body
      %s21 = ssub.s32 %s16, 1
      %s22 = ssub.s32 %s16, 2
      %s23 = sadd.s32 %s16, 1
      %s24 = ssub.s32 %s16, %s23
      %p25 = scmp.eq.s32.totalorder %s24, 0
      %s27 = sadd.s32 %s26, 1
      %s28 = scalar_select %p25, %s26, %s27
      %p31 = pneg %p25
      %p32 = scmp.eq.s32.totalorder %s16, 3
      %p33 = por %p31, %p32
      %p34 = scmp.ne.s32.totalorder %s26, %s29
      %p35 = scmp.eq.s32.totalorder %s16, 0
      %p36 = por %p34, %p35
      %p37 = scmp.ne.s32.totalorder %s26, %s29
      %p38 = scmp.eq.s32.totalorder %s21, 3
      %p39 = por %p37, %p38
      %p40 = scmp.ne.s32.totalorder %s29, %s30
      %p41 = scmp.eq.s32.totalorder %s21, 0
      %p42 = por %p40, %p41
      %p43 = scmp.ne.s32.totalorder %s29, %s30
      %p44 = scmp.eq.s32.totalorder %s22, 3
      %p45 = por %p43, %p44
      %p47 = scmp.ne.s32.totalorder %s30, %s46
      %p48 = scmp.eq.s32.totalorder %s22, 0
      %p49 = por %p47, %p48
      %s51 = sadd.s32 %s50, 1
      %p54 = scmp.eq.s32.totalorder %s16, 3
      %p55 = scmp.ne.s32.totalorder %s50, %s52
      %p56 = scmp.eq.s32.totalorder %s16, 0
      %p57 = por %p55, %p56
      %p58 = scmp.ne.s32.totalorder %s50, %s52
      %p59 = scmp.eq.s32.totalorder %s21, 3
      %p60 = por %p58, %p59
      %p61 = scmp.ne.s32.totalorder %s52, %s53
      %p62 = scmp.eq.s32.totalorder %s21, 0
      %p63 = por %p61, %p62
      %p64 = scmp.ne.s32.totalorder %s52, %s53
      %p65 = scmp.eq.s32.totalorder %s22, 3
      %p66 = por %p64, %p65
      %p68 = scmp.ne.s32.totalorder %s53, %s67
      %p69 = scmp.eq.s32.totalorder %s22, 0
      %p70 = por %p68, %p69
      %s72 = sadd.s32 %s71, 1
      %p75 = scmp.eq.s32.totalorder %s16, 3
      %p76 = scmp.ne.s32.totalorder %s71, %s73
      %p77 = scmp.eq.s32.totalorder %s16, 0
      %p78 = por %p76, %p77
      %p79 = scmp.ne.s32.totalorder %s71, %s73
      %p80 = scmp.eq.s32.totalorder %s21, 3
      %p81 = por %p79, %p80
      %p82 = scmp.ne.s32.totalorder %s73, %s74
      %p83 = scmp.eq.s32.totalorder %s21, 0
      %p84 = por %p82, %p83
      %p85 = scmp.ne.s32.totalorder %s73, %s74
      %p86 = scmp.eq.s32.totalorder %s22, 3
      %p87 = por %p85, %p86
      %p89 = scmp.ne.s32.totalorder %s74, %s88
      %p90 = scmp.eq.s32.totalorder %s22, 0
      %p91 = por %p89, %p90
      %s92 = ssub.s32 %s16, %s23
      %p93 = scmp.eq.s32.totalorder %s92, 0
      %s95 = sadd.s32 %s94, 1
      %s96 = scalar_select %p93, %s94, %s95
      %p99 = pneg %p93
      %p100 = scmp.eq.s32.totalorder %s16, 3
      %p101 = por %p99, %p100
      %p102 = scmp.ne.s32.totalorder %s94, %s97
      %p103 = scmp.eq.s32.totalorder %s16, 0
      %p104 = por %p102, %p103
      %p105 = scmp.ne.s32.totalorder %s94, %s97
      %p106 = scmp.eq.s32.totalorder %s21, 3
      %p107 = por %p105, %p106
      %p108 = scmp.ne.s32.totalorder %s97, %s98
      %p109 = scmp.eq.s32.totalorder %s21, 0
      %p110 = por %p108, %p109
      %p111 = scmp.ne.s32.totalorder %s97, %s98
      %p112 = scmp.eq.s32.totalorder %s22, 3
      %p113 = por %p111, %p112
      %p115 = scmp.ne.s32.totalorder %s98, %s114
      %p116 = scmp.eq.s32.totalorder %s22, 0
      %p117 = por %p115, %p116
      %p118 = scmp.le.s32.totalorder 1, %s16
      %p119 = scmp.lt.s32.totalorder %s16, 5
      %p120 = pnand %p118, %p119
      %p121 = pneg %p120
      // Predicated region
      $region9: #{tpu_custom_call.1} parent=5 // pred_check
        _
      $region10: #{tpu_custom_call.1} parent=5 // pred_check_branch
        %123 = sbr.rel (%p120) target = $region12
      $region11: #{tpu_custom_call.1} parent=5 // pred_region
        %s124 = ssub.s32 %s16, 1
        // Predicated region
        $region13: #{tpu_custom_call.1} parent=11 // pred_check
          %p125 = pneg %p63
        $region14: #{tpu_custom_call.1} parent=11 // pred_check_branch
          %127 = sbr.rel (%p125) target = $region16
        $region15: #{tpu_custom_call.1} parent=11 // pred_region
          _
        $region16: #{tpu_custom_call.1} parent=11 // pred_fallthru
          _
        // Predicated region
        $region17: #{tpu_custom_call.1} parent=11 // pred_check
          %p128 = pneg %p84
        $region18: #{tpu_custom_call.1} parent=11 // pred_check_branch
          %130 = sbr.rel (%p128) target = $region20
        $region19: #{tpu_custom_call.1} parent=11 // pred_region
          %s132 = ssub.s32 9216, 9216
          %133 = vsyncadd [#allocation6], %s132
          %s134 = sshll.u32 [#allocation5], 4
          %s135 = int_to_ptr.vmem [resolvable:$true] %s134
          %140 = dma.hbm_to_vmem [thread:$0]  %s2, 9216, %s135, [#allocation6], 192, 192, 12
        $region20: #{tpu_custom_call.1} parent=11 // pred_fallthru
          _
      $region12: #{tpu_custom_call.1} parent=5 // pred_fallthru
        _
      %p141 = scmp.lt.s32.totalorder %s16, 4
      // Predicated region
      $region21: #{tpu_custom_call.1} parent=5 // pred_check
        %p142 = pneg %p141
      $region22: #{tpu_custom_call.1} parent=5 // pred_check_branch
        %144 = sbr.rel (%p142) target = $region24
      $region23: #{tpu_custom_call.1} parent=5 // pred_region
        // Predicated region
        $region25: #{tpu_custom_call.1} parent=23 // pred_check
          %p145 = pneg %p36
        $region26: #{tpu_custom_call.1} parent=23 // pred_check_branch
          %147 = sbr.rel (%p145) target = $region28
        $region27: #{tpu_custom_call.1} parent=23 // pred_region
          %s148 = sand.u32 %s26, 1
          %s149 = scalar_lea.sflag [#allocation3], %s148
          %s150 = sand.u32 %s26, 1
          %s151 = smul.addr %s150, 24
          %s152 = scalar_lea.vmem [#allocation2], %s151
          %s154 = ssub.s32 384, 384
          %155 = vsyncadd %s149, %s154
          %s156 = smul.addr %s16, 3
          %s157 = smul.addr %s156, 128
          %s158 = scalar_lea.hbm %s0, %s157
          %s160 = sshll.u32 %s152, 4
          %s161 = int_to_ptr.vmem [resolvable:$true] %s160
          %163 = dma.hbm_to_vmem [thread:$0]  %s158, 384, %s161, %s149
        $region28: #{tpu_custom_call.1} parent=23 // pred_fallthru
          _
      $region24: #{tpu_custom_call.1} parent=5 // pred_fallthru
        _
      %p164 = scmp.le.s32.totalorder 1, %s16
      %p165 = scmp.lt.s32.totalorder %s16, 5
      %p166 = pnand %p164, %p165
      %p167 = pneg %p166
      // Predicated region
      $region29: #{tpu_custom_call.1} parent=5 // pred_check
        _
      $region30: #{tpu_custom_call.1} parent=5 // pred_check_branch
        %169 = sbr.rel (%p166) target = $region32
      $region31: #{tpu_custom_call.1} parent=5 // pred_region
        %s170 = ssub.s32 %s16, 1
        %s171 = sand.u32 %s29, 1
        %s172 = scalar_lea.sflag [#allocation3], %s171
        %s173 = sand.u32 %s29, 1
        %s174 = smul.addr %s173, 24
        %s175 = scalar_lea.vmem [#allocation2], %s174
        // Predicated region
        $region33: #{tpu_custom_call.1} parent=31 // pred_check
          %p176 = pneg %p42
        $region34: #{tpu_custom_call.1} parent=31 // pred_check_branch
          %178 = sbr.rel (%p176) target = $region36
        $region35: #{tpu_custom_call.1} parent=31 // pred_region
          %179 = dma.done %s172, 384
        $region36: #{tpu_custom_call.1} parent=31 // pred_fallthru
          _
        // Predicated region
        $region37: #{tpu_custom_call.1} parent=31 // pred_check
          %p180 = pneg %p84
        $region38: #{tpu_custom_call.1} parent=31 // pred_check_branch
          %182 = sbr.rel (%p180) target = $region40
        $region39: #{tpu_custom_call.1} parent=31 // pred_region
          %183 = dma.done [#allocation6], 9216
        $region40: #{tpu_custom_call.1} parent=31 // pred_fallthru
          _
        %s184 = sand.u32 %s29, 1
        %s185 = scalar_lea.sflag [#allocation3], %s184
        %s186 = sand.u32 %s29, 1
        %s187 = smul.addr %s186, 24
        %s188 = scalar_lea.vmem [#allocation2], %s187
        %p189 = pneg %p42
        %p190 = pneg %p39
        %p191 = pneg %p63
        %p192 = pneg %p60
        %p193 = pneg %p84
        %p194 = pneg %p81
        %p195 = pneg %p110
        %p196 = pneg %p107
        %s197 = sand.u32 %s97, 1
        %s198 = scalar_lea.sflag [#allocation4], %s197
        %s199 = sand.u32 %s97, 1
        %s200 = smul.addr %s199, 24
        %s201 = scalar_lea.vmem [#allocation7], %s200
        %v203 = vld [vmem:[%s175] sm:$0xff]
        %v204 = vld [vmem:[%s175 + $0x8] sm:$0xff]
        %v205 = vld [vmem:[%s175 + $0x10] sm:$0xff]
        %v206 = vld [vmem:[%s1] sm:$0x7]
        %v207 = vld [vmem:[#allocation5] sm:$0xff]
        %v208 = vld [vmem:[#allocation5 + $0x8] sm:$0xf]
        %v209 = vld [vmem:[#allocation5 + $0xc] sm:$0xff]
        %v210 = vld [vmem:[#allocation5 + $0x14] sm:$0xf]
        %v211 = vld [vmem:[#allocation5 + $0x18] sm:$0xff]
        %v212 = vld [vmem:[#allocation5 + $0x20] sm:$0xf]
        %v213 = vld [vmem:[#allocation5 + $0x24] sm:$0xff]
        %v214 = vld [vmem:[#allocation5 + $0x2c] sm:$0xf]
        %v215 = vld [vmem:[#allocation5 + $0x30] sm:$0xff]
        %v216 = vld [vmem:[#allocation5 + $0x38] sm:$0xf]
        %v217 = vld [vmem:[#allocation5 + $0x3c] sm:$0xff]
        %v218 = vld [vmem:[#allocation5 + $0x44] sm:$0xf]
        %v219 = vld [vmem:[#allocation5 + $0x48] sm:$0xff]
        %v220 = vld [vmem:[#allocation5 + $0x50] sm:$0xf]
        %v221 = vld [vmem:[#allocation5 + $0x54] sm:$0xff]
        %v222 = vld [vmem:[#allocation5 + $0x5c] sm:$0xf]
        %v223 = vld [vmem:[#allocation5 + $0x60] sm:$0xff]
        %v224 = vld [vmem:[#allocation5 + $0x68] sm:$0xf]
        %v225 = vld [vmem:[#allocation5 + $0x6c] sm:$0xff]
        %v226 = vld [vmem:[#allocation5 + $0x74] sm:$0xf]
        %v227 = vld [vmem:[#allocation5 + $0x78] sm:$0xff]
        %v228 = vld [vmem:[#allocation5 + $0x80] sm:$0xf]
        %v229 = vld [vmem:[#allocation5 + $0x84] sm:$0xff]
        %v230 = vld [vmem:[#allocation5 + $0x8c] sm:$0xf]
        %v231 = vld [vmem:[#allocation5 + $0x90] sm:$0xff]
        %v232 = vld [vmem:[#allocation5 + $0x98] sm:$0xf]
        %v233 = vld [vmem:[#allocation5 + $0x9c] sm:$0xff]
        %v234 = vld [vmem:[#allocation5 + $0xa4] sm:$0xf]
        %v235 = vld [vmem:[#allocation5 + $0xa8] sm:$0xff]
        %v236 = vld [vmem:[#allocation5 + $0xb0] sm:$0xf]
        %v237 = vld [vmem:[#allocation5 + $0xb4] sm:$0xff]
        %v238 = vld [vmem:[#allocation5 + $0xbc] sm:$0xf]
        %v239 = vld [vmem:[#allocation5 + $0xc0] sm:$0xff]
        %v240 = vld [vmem:[#allocation5 + $0xc8] sm:$0xf]
        %v241 = vld [vmem:[#allocation5 + $0xcc] sm:$0xff]
        %v242 = vld [vmem:[#allocation5 + $0xd4] sm:$0xf]
        %v243 = vld [vmem:[#allocation5 + $0xd8] sm:$0xff]
        %v244 = vld [vmem:[#allocation5 + $0xe0] sm:$0xf]
        %v245 = vld [vmem:[#allocation5 + $0xe4] sm:$0xff]
        %v246 = vld [vmem:[#allocation5 + $0xec] sm:$0xf]
        %v247 = vld [vmem:[#allocation5 + $0xf0] sm:$0xff]
        %v248 = vld [vmem:[#allocation5 + $0xf8] sm:$0xf]
        %v249 = vld [vmem:[#allocation5 + $0xfc] sm:$0xff]
        %v250 = vld [vmem:[#allocation5 + $0x104] sm:$0xf]
        %v251 = vld [vmem:[#allocation5 + $0x108] sm:$0xff]
        %v252 = vld [vmem:[#allocation5 + $0x110] sm:$0xf]
        %v253 = vld [vmem:[#allocation5 + $0x114] sm:$0xff]
        %v254 = vld [vmem:[#allocation5 + $0x11c] sm:$0xf]
        %v255 = vld [vmem:[#allocation5 + $0x120] sm:$0xff]
        %v256 = vld [vmem:[#allocation5 + $0x128] sm:$0xf]
        %v257 = vld [vmem:[#allocation5 + $0x12c] sm:$0xff]
        %v258 = vld [vmem:[#allocation5 + $0x134] sm:$0xf]
        %v259 = vld [vmem:[#allocation5 + $0x138] sm:$0xff]
        %v260 = vld [vmem:[#allocation5 + $0x140] sm:$0xf]
        %v261 = vld [vmem:[#allocation5 + $0x144] sm:$0xff]
        %v262 = vld [vmem:[#allocation5 + $0x14c] sm:$0xf]
        %v263 = vld [vmem:[#allocation5 + $0x150] sm:$0xff]
        %v264 = vld [vmem:[#allocation5 + $0x158] sm:$0xf]
        %v265 = vld [vmem:[#allocation5 + $0x15c] sm:$0xff]
        %v266 = vld [vmem:[#allocation5 + $0x164] sm:$0xf]
        %v267 = vld [vmem:[#allocation5 + $0x168] sm:$0xff]
        %v268 = vld [vmem:[#allocation5 + $0x170] sm:$0xf]
        %v269 = vld [vmem:[#allocation5 + $0x174] sm:$0xff]
        %v270 = vld [vmem:[#allocation5 + $0x17c] sm:$0xf]
        %v271 = vld [vmem:[#allocation5 + $0x180] sm:$0xff]
        %v272 = vld [vmem:[#allocation5 + $0x188] sm:$0xf]
        %v273 = vld [vmem:[#allocation5 + $0x18c] sm:$0xff]
        %v274 = vld [vmem:[#allocation5 + $0x194] sm:$0xf]
        %v275 = vld [vmem:[#allocation5 + $0x198] sm:$0xff]
        %v276 = vld [vmem:[#allocation5 + $0x1a0] sm:$0xf]
        %v277 = vld [vmem:[#allocation5 + $0x1a4] sm:$0xff]
        %v278 = vld [vmem:[#allocation5 + $0x1ac] sm:$0xf]
        %v279 = vld [vmem:[#allocation5 + $0x1b0] sm:$0xff]
        %v280 = vld [vmem:[#allocation5 + $0x1b8] sm:$0xf]
        %v281 = vld [vmem:[#allocation5 + $0x1bc] sm:$0xff]
        %v282 = vld [vmem:[#allocation5 + $0x1c4] sm:$0xf]
        %v283 = vld [vmem:[#allocation5 + $0x1c8] sm:$0xff]
        %v284 = vld [vmem:[#allocation5 + $0x1d0] sm:$0xf]
        %v285 = vld [vmem:[#allocation5 + $0x1d4] sm:$0xff]
        %v286 = vld [vmem:[#allocation5 + $0x1dc] sm:$0xf]
        %v287 = vld [vmem:[#allocation5 + $0x1e0] sm:$0xff]
        %v288 = vld [vmem:[#allocation5 + $0x1e8] sm:$0xf]
        %v289 = vld [vmem:[#allocation5 + $0x1ec] sm:$0xff]
        %v290 = vld [vmem:[#allocation5 + $0x1f4] sm:$0xf]
        %v291 = vld [vmem:[#allocation5 + $0x1f8] sm:$0xff]
        %v292 = vld [vmem:[#allocation5 + $0x200] sm:$0xf]
        %v293 = vld [vmem:[#allocation5 + $0x204] sm:$0xff]
        %v294 = vld [vmem:[#allocation5 + $0x20c] sm:$0xf]
        %v295 = vld [vmem:[#allocation5 + $0x210] sm:$0xff]
        %v296 = vld [vmem:[#allocation5 + $0x218] sm:$0xf]
        %v297 = vld [vmem:[#allocation5 + $0x21c] sm:$0xff]
        %v298 = vld [vmem:[#allocation5 + $0x224] sm:$0xf]
        %v299 = vld [vmem:[#allocation5 + $0x228] sm:$0xff]
        %v300 = vld [vmem:[#allocation5 + $0x230] sm:$0xf]
        %v301 = vld [vmem:[#allocation5 + $0x234] sm:$0xff]
        %v302 = vld [vmem:[#allocation5 + $0x23c] sm:$0xf]
        %v303 = vpack.c.bf16 %v203, %v203
        %v304 = vpack.c.bf16 %v204, %v204
        %v305 = vpack.c.bf16 %v205, %v205
        %v306 = vunpack.c.l.bf16 %v303
        %v307 = vunpack.c.l.bf16 %v304
        %v308 = vunpack.c.l.bf16 %v305
        %v309 = vsub.f32 %v203, %v306
        %v310 = vsub.f32 %v204, %v307
        %v311 = vsub.f32 %v205, %v308
        %v312 = vpack.c.bf16 %v309, %v309
        %v313 = vpack.c.bf16 %v310, %v310
        %v314 = vpack.c.bf16 %v311, %v311
        %v411 = vunpack.c.l.b16 %v207
        %v412 = vunpack.c.h.b16 %v207
        %v413 = vunpack.c.l.b16 %v208
        %v414 = vunpack.c.l.b16 %v209
        %v415 = vunpack.c.h.b16 %v209
        %v416 = vunpack.c.l.b16 %v210
        %v417 = vunpack.c.l.b16 %v211
        %v418 = vunpack.c.h.b16 %v211
        %v419 = vunpack.c.l.b16 %v212
        %v420 = vunpack.c.l.b16 %v213
        %v421 = vunpack.c.h.b16 %v213
        %v422 = vunpack.c.l.b16 %v214
        %v423 = vunpack.c.l.b16 %v215
        %v424 = vunpack.c.h.b16 %v215
        %v425 = vunpack.c.l.b16 %v216
        %v426 = vunpack.c.l.b16 %v217
        %v427 = vunpack.c.h.b16 %v217
        %v428 = vunpack.c.l.b16 %v218
        %v429 = vunpack.c.l.b16 %v219
        %v430 = vunpack.c.h.b16 %v219
        %v431 = vunpack.c.l.b16 %v220
        %v432 = vunpack.c.l.b16 %v221
        %v433 = vunpack.c.h.b16 %v221
        %v434 = vunpack.c.l.b16 %v222
        %v435 = vunpack.c.l.b16 %v223
        %v436 = vunpack.c.h.b16 %v223
        %v437 = vunpack.c.l.b16 %v224
        %v438 = vunpack.c.l.b16 %v225
        %v439 = vunpack.c.h.b16 %v225
        %v440 = vunpack.c.l.b16 %v226
        %v441 = vunpack.c.l.b16 %v227
        %v442 = vunpack.c.h.b16 %v227
        %v443 = vunpack.c.l.b16 %v228
        %v444 = vunpack.c.l.b16 %v229
        %v445 = vunpack.c.h.b16 %v229
        %v446 = vunpack.c.l.b16 %v230
        %v447 = vunpack.c.l.b16 %v231
        %v448 = vunpack.c.h.b16 %v231
        %v449 = vunpack.c.l.b16 %v232
        %v450 = vunpack.c.l.b16 %v233
        %v451 = vunpack.c.h.b16 %v233
        %v452 = vunpack.c.l.b16 %v234
        %v453 = vunpack.c.l.b16 %v235
        %v454 = vunpack.c.h.b16 %v235
        %v455 = vunpack.c.l.b16 %v236
        %v456 = vunpack.c.l.b16 %v237
        %v457 = vunpack.c.h.b16 %v237
        %v458 = vunpack.c.l.b16 %v238
        %v459 = vunpack.c.l.b16 %v239
        %v460 = vunpack.c.h.b16 %v239
        %v461 = vunpack.c.l.b16 %v240
        %v462 = vunpack.c.l.b16 %v241
        %v463 = vunpack.c.h.b16 %v241
        %v464 = vunpack.c.l.b16 %v242
        %v465 = vunpack.c.l.b16 %v243
        %v466 = vunpack.c.h.b16 %v243
        %v467 = vunpack.c.l.b16 %v244
        %v468 = vunpack.c.l.b16 %v245
        %v469 = vunpack.c.h.b16 %v245
        %v470 = vunpack.c.l.b16 %v246
        %v471 = vunpack.c.l.b16 %v247
        %v472 = vunpack.c.h.b16 %v247
        %v473 = vunpack.c.l.b16 %v248
        %v474 = vunpack.c.l.b16 %v249
        %v475 = vunpack.c.h.b16 %v249
        %v476 = vunpack.c.l.b16 %v250
        %v477 = vunpack.c.l.b16 %v251
        %v478 = vunpack.c.h.b16 %v251
        %v479 = vunpack.c.l.b16 %v252
        %v480 = vunpack.c.l.b16 %v253
        %v481 = vunpack.c.h.b16 %v253
        %v482 = vunpack.c.l.b16 %v254
        %v483 = vunpack.c.l.b16 %v255
        %v484 = vunpack.c.h.b16 %v255
        %v485 = vunpack.c.l.b16 %v256
        %v486 = vunpack.c.l.b16 %v257
        %v487 = vunpack.c.h.b16 %v257
        %v488 = vunpack.c.l.b16 %v258
        %v489 = vunpack.c.l.b16 %v259
        %v490 = vunpack.c.h.b16 %v259
        %v491 = vunpack.c.l.b16 %v260
        %v492 = vunpack.c.l.b16 %v261
        %v493 = vunpack.c.h.b16 %v261
        %v494 = vunpack.c.l.b16 %v262
        %v495 = vunpack.c.l.b16 %v263
        %v496 = vunpack.c.h.b16 %v263
        %v497 = vunpack.c.l.b16 %v264
        %v498 = vunpack.c.l.b16 %v265
        %v499 = vunpack.c.h.b16 %v265
        %v500 = vunpack.c.l.b16 %v266
        %v501 = vunpack.c.l.b16 %v267
        %v502 = vunpack.c.h.b16 %v267
        %v503 = vunpack.c.l.b16 %v268
        %v504 = vunpack.c.l.b16 %v269
        %v505 = vunpack.c.h.b16 %v269
        %v506 = vunpack.c.l.b16 %v270
        %v507 = vunpack.c.l.b16 %v271
        %v508 = vunpack.c.h.b16 %v271
        %v509 = vunpack.c.l.b16 %v272
        %v510 = vunpack.c.l.b16 %v273
        %v511 = vunpack.c.h.b16 %v273
        %v512 = vunpack.c.l.b16 %v274
        %v513 = vunpack.c.l.b16 %v275
        %v514 = vunpack.c.h.b16 %v275
        %v515 = vunpack.c.l.b16 %v276
        %v516 = vunpack.c.l.b16 %v277
        %v517 = vunpack.c.h.b16 %v277
        %v518 = vunpack.c.l.b16 %v278
        %v519 = vunpack.c.l.b16 %v279
        %v520 = vunpack.c.h.b16 %v279
        %v521 = vunpack.c.l.b16 %v280
        %v522 = vunpack.c.l.b16 %v281
        %v523 = vunpack.c.h.b16 %v281
        %v524 = vunpack.c.l.b16 %v282
        %v525 = vunpack.c.l.b16 %v283
        %v526 = vunpack.c.h.b16 %v283
        %v527 = vunpack.c.l.b16 %v284
        %v528 = vunpack.c.l.b16 %v285
        %v529 = vunpack.c.h.b16 %v285
        %v530 = vunpack.c.l.b16 %v286
        %v531 = vunpack.c.l.b16 %v287
        %v532 = vunpack.c.h.b16 %v287
        %v533 = vunpack.c.l.b16 %v288
        %v534 = vunpack.c.l.b16 %v289
        %v535 = vunpack.c.h.b16 %v289
        %v536 = vunpack.c.l.b16 %v290
        %v537 = vunpack.c.l.b16 %v291
        %v538 = vunpack.c.h.b16 %v291
        %v539 = vunpack.c.l.b16 %v292
        %v540 = vunpack.c.l.b16 %v293
        %v541 = vunpack.c.h.b16 %v293
        %v542 = vunpack.c.l.b16 %v294
        %v543 = vunpack.c.l.b16 %v295
        %v544 = vunpack.c.h.b16 %v295
        %v545 = vunpack.c.l.b16 %v296
        %v546 = vunpack.c.l.b16 %v297
        %v547 = vunpack.c.h.b16 %v297
        %v548 = vunpack.c.l.b16 %v298
        %v549 = vunpack.c.l.b16 %v299
        %v550 = vunpack.c.h.b16 %v299
        %v551 = vunpack.c.l.b16 %v300
        %v552 = vunpack.c.l.b16 %v301
        %v553 = vunpack.c.h.b16 %v301
        %v554 = vunpack.c.l.b16 %v302
        %v555 = vpack.c.b16 %v414, %v411
        %v556 = vpack.c.b16 %v415, %v412
        %v557 = vpack.c.b16 %v416, %v413
        %v558 = vpack.c.b16 %v420, %v417
        %v559 = vpack.c.b16 %v421, %v418
        %v560 = vpack.c.b16 %v422, %v419
        %v561 = vpack.c.b16 %v426, %v423
        %v562 = vpack.c.b16 %v427, %v424
        %v563 = vpack.c.b16 %v428, %v425
        %v564 = vpack.c.b16 %v432, %v429
        %v565 = vpack.c.b16 %v433, %v430
        %v566 = vpack.c.b16 %v434, %v431
        %v567 = vpack.c.b16 %v438, %v435
        %v568 = vpack.c.b16 %v439, %v436
        %v569 = vpack.c.b16 %v440, %v437
        %v570 = vpack.c.b16 %v444, %v441
        %v571 = vpack.c.b16 %v445, %v442
        %v572 = vpack.c.b16 %v446, %v443
        %v573 = vpack.c.b16 %v450, %v447
        %v574 = vpack.c.b16 %v451, %v448
        %v575 = vpack.c.b16 %v452, %v449
        %v576 = vpack.c.b16 %v456, %v453
        %v577 = vpack.c.b16 %v457, %v454
        %v578 = vpack.c.b16 %v458, %v455
        %v579 = vpack.c.b16 %v462, %v459
        %v580 = vpack.c.b16 %v463, %v460
        %v581 = vpack.c.b16 %v464, %v461
        %v582 = vpack.c.b16 %v468, %v465
        %v583 = vpack.c.b16 %v469, %v466
        %v584 = vpack.c.b16 %v470, %v467
        %v585 = vpack.c.b16 %v474, %v471
        %v586 = vpack.c.b16 %v475, %v472
        %v587 = vpack.c.b16 %v476, %v473
        %v588 = vpack.c.b16 %v480, %v477
        %v589 = vpack.c.b16 %v481, %v478
        %v590 = vpack.c.b16 %v482, %v479
        %v591 = vpack.c.b16 %v486, %v483
        %v592 = vpack.c.b16 %v487, %v484
        %v593 = vpack.c.b16 %v488, %v485
        %v594 = vpack.c.b16 %v492, %v489
        %v595 = vpack.c.b16 %v493, %v490
        %v596 = vpack.c.b16 %v494, %v491
        %v597 = vpack.c.b16 %v498, %v495
        %v598 = vpack.c.b16 %v499, %v496
        %v599 = vpack.c.b16 %v500, %v497
        %v600 = vpack.c.b16 %v504, %v501
        %v601 = vpack.c.b16 %v505, %v502
        %v602 = vpack.c.b16 %v506, %v503
        %v603 = vpack.c.b16 %v510, %v507
        %v604 = vpack.c.b16 %v511, %v508
        %v605 = vpack.c.b16 %v512, %v509
        %v606 = vpack.c.b16 %v516, %v513
        %v607 = vpack.c.b16 %v517, %v514
        %v608 = vpack.c.b16 %v518, %v515
        %v609 = vpack.c.b16 %v522, %v519
        %v610 = vpack.c.b16 %v523, %v520
        %v611 = vpack.c.b16 %v524, %v521
        %v612 = vpack.c.b16 %v528, %v525
        %v613 = vpack.c.b16 %v529, %v526
        %v614 = vpack.c.b16 %v530, %v527
        %v615 = vpack.c.b16 %v534, %v531
        %v616 = vpack.c.b16 %v535, %v532
        %v617 = vpack.c.b16 %v536, %v533
        %v618 = vpack.c.b16 %v540, %v537
        %v619 = vpack.c.b16 %v541, %v538
        %v620 = vpack.c.b16 %v542, %v539
        %v621 = vpack.c.b16 %v546, %v543
        %v622 = vpack.c.b16 %v547, %v544
        %v623 = vpack.c.b16 %v548, %v545
        %v624 = vpack.c.b16 %v552, %v549
        %v625 = vpack.c.b16 %v553, %v550
        %v626 = vpack.c.b16 %v554, %v551
        %699 = vmatprep.subr.bf16.mxu0 %v556
        %700 = vmatpush1.bf16.msra.mxu0 %v555
        %701 = vmatprep.subr.bf16.mxu0 %v559
        %702 = vmatpush1.bf16.msra.mxu0 %v558
        %703 = vmatprep.subr.bf16.mxu0 %v562
        %704 = vmatpush1.bf16.msra.mxu0 %v561
        %705 = vmatprep.subr.bf16.mxu0 %v565
        %706 = vmatpush1.bf16.msra.mxu0 %v564
        %707 = vmatprep.subr.bf16.mxu0 %v568
        %708 = vmatpush1.bf16.msra.mxu0 %v567
        %709 = vmatprep.subr.bf16.mxu0 %v571
        %710 = vmatpush1.bf16.msra.mxu0 %v570
        %711 = vmatprep.subr.bf16.mxu0 %v574
        %712 = vmatpush1.bf16.msra.mxu0 %v573
        %713 = vmatprep.subr.bf16.mxu0 %v577
        %714 = vmatpush1.bf16.msra.mxu0 %v576
        %715 = vmatprep.subr.bf16.mxu0 %v580
        %716 = vmatpush1.bf16.msra.mxu0 %v579
        %717 = vmatprep.subr.bf16.mxu0 %v583
        %718 = vmatpush1.bf16.msra.mxu0 %v582
        %719 = vmatprep.subr.bf16.mxu0 %v586
        %720 = vmatpush1.bf16.msra.mxu0 %v585
        %721 = vmatprep.subr.bf16.mxu0 %v589
        %722 = vmatpush1.bf16.msra.mxu0 %v588
        %723 = vmatprep.subr.bf16.mxu0 %v592
        %724 = vmatpush1.bf16.msra.mxu0 %v591
        %725 = vmatprep.subr.bf16.mxu0 %v595
        %726 = vmatpush1.bf16.msra.mxu0 %v594
        %727 = vmatprep.subr.bf16.mxu0 %v598
        %728 = vmatpush1.bf16.msra.mxu0 %v597
        %729 = vmatprep.subr.bf16.mxu0 %v601
        %730 = vmatpush1.bf16.msra.mxu0 %v600
        %731 = vmatprep.mubr.bf16.mxu0 %v313
        %732 = vmatmul.mubr.bf16.gmra.mrb[0].mxu0 %v312
        %v733 = vpop.f32.mrb[0].mxu0
        %v734 = vadd.f32 0.0, %v733
        %v735 = vpop.f32.mrb[0].mxu0
        %v736 = vadd.f32 0.0, %v735
        %v737 = vpop.f32.mrb[0].mxu0
        %v738 = vpop.f32.mrb[0].mxu0
        %739 = vdwg.mxu0
        %740 = vmatprep.subr.bf16.mxu0 %v604
        %741 = vmatpush1.bf16.msra.mxu0 %v603
        %742 = vmatprep.subr.bf16.mxu0 %v607
        %743 = vmatpush1.bf16.msra.mxu0 %v606
        %744 = vmatprep.subr.bf16.mxu0 %v610
        %745 = vmatpush1.bf16.msra.mxu0 %v609
        %746 = vmatprep.subr.bf16.mxu0 %v613
        %747 = vmatpush1.bf16.msra.mxu0 %v612
        %748 = vmatprep.subr.bf16.mxu0 %v616
        %749 = vmatpush1.bf16.msra.mxu0 %v615
        %750 = vmatprep.subr.bf16.mxu0 %v619
        %751 = vmatpush1.bf16.msra.mxu0 %v618
        %752 = vmatprep.subr.bf16.mxu0 %v622
        %753 = vmatpush1.bf16.msra.mxu0 %v621
        %754 = vmatprep.subr.bf16.mxu0 %v625
        %755 = vmatpush1.bf16.msra.mxu0 %v624
        %756 = vmatprep.subr.bf16.mxu0 0
        %757 = vmatpush1.bf16.msra.mxu0 0
        %758 = vmatprep.subr.bf16.mxu0 0
        %759 = vmatpush1.bf16.msra.mxu0 0
        %760 = vmatprep.subr.bf16.mxu0 0
        %761 = vmatpush1.bf16.msra.mxu0 0
        %762 = vmatprep.subr.bf16.mxu0 0
        %763 = vmatpush1.bf16.msra.mxu0 0
        %764 = vmatprep.subr.bf16.mxu0 0
        %765 = vmatpush1.bf16.msra.mxu0 0
        %766 = vmatprep.subr.bf16.mxu0 0
        %767 = vmatpush1.bf16.msra.mxu0 0
        %768 = vmatprep.subr.bf16.mxu0 0
        %769 = vmatpush1.bf16.msra.mxu0 0
        %770 = vmatprep.subr.bf16.mxu0 0
        %771 = vmatpush1.bf16.msra.mxu0 0
        %772 = vmatprep.mubr.bf16.mxu0 0
        %773 = vmatmul.mubr.bf16.gmra.mrb[0].mxu0 %v314
        %v774 = vpop.f32.mrb[0].mxu0
        %v775 = vadd.f32 %v734, %v774
        %v776 = vpop.f32.mrb[0].mxu0
        %v777 = vadd.f32 %v736, %v776
        %v778 = vpop.f32.mrb[0].mxu0
        %v779 = vpop.f32.mrb[0].mxu0
        %780 = vdwg.mxu0
        %781 = vmatprep.subr.bf16.mxu0 0
        %782 = vmatpush1.bf16.msra.mxu0 %v557
        %783 = vmatprep.subr.bf16.mxu0 0
        %784 = vmatpush1.bf16.msra.mxu0 %v560
        %785 = vmatprep.subr.bf16.mxu0 0
        %786 = vmatpush1.bf16.msra.mxu0 %v563
        %787 = vmatprep.subr.bf16.mxu0 0
        %788 = vmatpush1.bf16.msra.mxu0 %v566
        %789 = vmatprep.subr.bf16.mxu0 0
        %790 = vmatpush1.bf16.msra.mxu0 %v569
        %791 = vmatprep.subr.bf16.mxu0 0
        %792 = vmatpush1.bf16.msra.mxu0 %v572
        %793 = vmatprep.subr.bf16.mxu0 0
        %794 = vmatpush1.bf16.msra.mxu0 %v575
        %795 = vmatprep.subr.bf16.mxu0 0
        %796 = vmatpush1.bf16.msra.mxu0 %v578
        %797 = vmatprep.subr.bf16.mxu0 0
        %798 = vmatpush1.bf16.msra.mxu0 %v581
        %799 = vmatprep.subr.bf16.mxu0 0
        %800 = vmatpush1.bf16.msra.mxu0 %v584
        %801 = vmatprep.subr.bf16.mxu0 0
        %802 = vmatpush1.bf16.msra.mxu0 %v587
        %803 = vmatprep.subr.bf16.mxu0 0
        %804 = vmatpush1.bf16.msra.mxu0 %v590
        %805 = vmatprep.subr.bf16.mxu0 0
        %806 = vmatpush1.bf16.msra.mxu0 %v593
        %807 = vmatprep.subr.bf16.mxu0 0
        %808 = vmatpush1.bf16.msra.mxu0 %v596
        %809 = vmatprep.subr.bf16.mxu0 0
        %810 = vmatpush1.bf16.msra.mxu0 %v599
        %811 = vmatprep.subr.bf16.mxu0 0
        %812 = vmatpush1.bf16.msra.mxu0 %v602
        %813 = vmatprep.mubr.bf16.mxu0 %v313
        %814 = vmatmul.mubr.bf16.gmra.mrb[0].mxu0 %v312
        %v815 = vpop.f32.mrb[0].mxu0
        %v816 = vadd.f32 0.0, %v815
        %v817 = vpop.f32.mrb[0].mxu0
        %v818 = vpop.f32.mrb[0].mxu0
        %v819 = vpop.f32.mrb[0].mxu0
        %820 = vdwg.mxu0
        %821 = vmatprep.subr.bf16.mxu0 0
        %822 = vmatpush1.bf16.msra.mxu0 %v605
        %823 = vmatprep.subr.bf16.mxu0 0
        %824 = vmatpush1.bf16.msra.mxu0 %v608
        %825 = vmatprep.subr.bf16.mxu0 0
        %826 = vmatpush1.bf16.msra.mxu0 %v611
        %827 = vmatprep.subr.bf16.mxu0 0
        %828 = vmatpush1.bf16.msra.mxu0 %v614
        %829 = vmatprep.subr.bf16.mxu0 0
        %830 = vmatpush1.bf16.msra.mxu0 %v617
        %831 = vmatprep.subr.bf16.mxu0 0
        %832 = vmatpush1.bf16.msra.mxu0 %v620
        %833 = vmatprep.subr.bf16.mxu0 0
        %834 = vmatpush1.bf16.msra.mxu0 %v623
        %835 = vmatprep.subr.bf16.mxu0 0
        %836 = vmatpush1.bf16.msra.mxu0 %v626
        %837 = vmatprep.subr.bf16.mxu0 0
        %838 = vmatpush1.bf16.msra.mxu0 0
        %839 = vmatprep.subr.bf16.mxu0 0
        %840 = vmatpush1.bf16.msra.mxu0 0
        %841 = vmatprep.subr.bf16.mxu0 0
        %842 = vmatpush1.bf16.msra.mxu0 0
        %843 = vmatprep.subr.bf16.mxu0 0
        %844 = vmatpush1.bf16.msra.mxu0 0
        %845 = vmatprep.subr.bf16.mxu0 0
        %846 = vmatpush1.bf16.msra.mxu0 0
        %847 = vmatprep.subr.bf16.mxu0 0
        %848 = vmatpush1.bf16.msra.mxu0 0
        %849 = vmatprep.subr.bf16.mxu0 0
        %850 = vmatpush1.bf16.msra.mxu0 0
        %851 = vmatprep.subr.bf16.mxu0 0
        %852 = vmatpush1.bf16.msra.mxu0 0
        %853 = vmatprep.mubr.bf16.mxu0 0
        %854 = vmatmul.mubr.bf16.gmra.mrb[0].mxu0 %v314
        %v855 = vpop.f32.mrb[0].mxu0
        %v856 = vadd.f32 %v816, %v855
        %v857 = vpop.f32.mrb[0].mxu0
        %v858 = vpop.f32.mrb[0].mxu0
        %v859 = vpop.f32.mrb[0].mxu0
        %860 = vdwg.mxu0
        %861 = vmatprep.subr.bf16.mxu0 %v556
        %862 = vmatpush1.bf16.msra.mxu0 %v555
        %863 = vmatprep.subr.bf16.mxu0 %v559
        %864 = vmatpush1.bf16.msra.mxu0 %v558
        %865 = vmatprep.subr.bf16.mxu0 %v562
        %866 = vmatpush1.bf16.msra.mxu0 %v561
        %867 = vmatprep.subr.bf16.mxu0 %v565
        %868 = vmatpush1.bf16.msra.mxu0 %v564
        %869 = vmatprep.subr.bf16.mxu0 %v568
        %870 = vmatpush1.bf16.msra.mxu0 %v567
        %871 = vmatprep.subr.bf16.mxu0 %v571
        %872 = vmatpush1.bf16.msra.mxu0 %v570
        %873 = vmatprep.subr.bf16.mxu0 %v574
        %874 = vmatpush1.bf16.msra.mxu0 %v573
        %875 = vmatprep.subr.bf16.mxu0 %v577
        %876 = vmatpush1.bf16.msra.mxu0 %v576
        %877 = vmatprep.subr.bf16.mxu0 %v580
        %878 = vmatpush1.bf16.msra.mxu0 %v579
        %879 = vmatprep.subr.bf16.mxu0 %v583
        %880 = vmatpush1.bf16.msra.mxu0 %v582
        %881 = vmatprep.subr.bf16.mxu0 %v586
        %882 = vmatpush1.bf16.msra.mxu0 %v585
        %883 = vmatprep.subr.bf16.mxu0 %v589
        %884 = vmatpush1.bf16.msra.mxu0 %v588
        %885 = vmatprep.subr.bf16.mxu0 %v592
        %886 = vmatpush1.bf16.msra.mxu0 %v591
        %887 = vmatprep.subr.bf16.mxu0 %v595
        %888 = vmatpush1.bf16.msra.mxu0 %v594
        %889 = vmatprep.subr.bf16.mxu0 %v598
        %890 = vmatpush1.bf16.msra.mxu0 %v597
        %891 = vmatprep.subr.bf16.mxu0 %v601
        %892 = vmatpush1.bf16.msra.mxu0 %v600
        %893 = vmatprep.mubr.bf16.mxu0 %v304
        %894 = vmatmul.mubr.bf16.gmra.mrb[0].mxu0 %v303
        %v895 = vpop.f32.mrb[0].mxu0
        %v896 = vadd.f32 %v775, %v895
        %v897 = vpop.f32.mrb[0].mxu0
        %v898 = vadd.f32 %v777, %v897
        %v899 = vpop.f32.mrb[0].mxu0
        %v900 = vpop.f32.mrb[0].mxu0
        %901 = vdwg.mxu0
        %902 = vmatprep.subr.bf16.mxu0 %v604
        %903 = vmatpush1.bf16.msra.mxu0 %v603
        %904 = vmatprep.subr.bf16.mxu0 %v607
        %905 = vmatpush1.bf16.msra.mxu0 %v606
        %906 = vmatprep.subr.bf16.mxu0 %v610
        %907 = vmatpush1.bf16.msra.mxu0 %v609
        %908 = vmatprep.subr.bf16.mxu0 %v613
        %909 = vmatpush1.bf16.msra.mxu0 %v612
        %910 = vmatprep.subr.bf16.mxu0 %v616
        %911 = vmatpush1.bf16.msra.mxu0 %v615
        %912 = vmatprep.subr.bf16.mxu0 %v619
        %913 = vmatpush1.bf16.msra.mxu0 %v618
        %914 = vmatprep.subr.bf16.mxu0 %v622
        %915 = vmatpush1.bf16.msra.mxu0 %v621
        %916 = vmatprep.subr.bf16.mxu0 %v625
        %917 = vmatpush1.bf16.msra.mxu0 %v624
        %918 = vmatprep.subr.bf16.mxu0 0
        %919 = vmatpush1.bf16.msra.mxu0 0
        %920 = vmatprep.subr.bf16.mxu0 0
        %921 = vmatpush1.bf16.msra.mxu0 0
        %922 = vmatprep.subr.bf16.mxu0 0
        %923 = vmatpush1.bf16.msra.mxu0 0
        %924 = vmatprep.subr.bf16.mxu0 0
        %925 = vmatpush1.bf16.msra.mxu0 0
        %926 = vmatprep.subr.bf16.mxu0 0
        %927 = vmatpush1.bf16.msra.mxu0 0
        %928 = vmatprep.subr.bf16.mxu0 0
        %929 = vmatpush1.bf16.msra.mxu0 0
        %930 = vmatprep.subr.bf16.mxu0 0
        %931 = vmatpush1.bf16.msra.mxu0 0
        %932 = vmatprep.subr.bf16.mxu0 0
        %933 = vmatpush1.bf16.msra.mxu0 0
        %934 = vmatprep.mubr.bf16.mxu0 0
        %935 = vmatmul.mubr.bf16.gmra.mrb[0].mxu0 %v305
        %v936 = vpop.f32.mrb[0].mxu0
        %v937 = vadd.f32 %v896, %v936
        %v938 = vpop.f32.mrb[0].mxu0
        %v939 = vadd.f32 %v898, %v938
        %v940 = vpop.f32.mrb[0].mxu0
        %v941 = vpop.f32.mrb[0].mxu0
        %942 = vdwg.mxu0
        %943 = vmatprep.subr.bf16.mxu0 0
        %944 = vmatpush1.bf16.msra.mxu0 %v557
        %945 = vmatprep.subr.bf16.mxu0 0
        %946 = vmatpush1.bf16.msra.mxu0 %v560
        %947 = vmatprep.subr.bf16.mxu0 0
        %948 = vmatpush1.bf16.msra.mxu0 %v563
        %949 = vmatprep.subr.bf16.mxu0 0
        %950 = vmatpush1.bf16.msra.mxu0 %v566
        %951 = vmatprep.subr.bf16.mxu0 0
        %952 = vmatpush1.bf16.msra.mxu0 %v569
        %953 = vmatprep.subr.bf16.mxu0 0
        %954 = vmatpush1.bf16.msra.mxu0 %v572
        %955 = vmatprep.subr.bf16.mxu0 0
        %956 = vmatpush1.bf16.msra.mxu0 %v575
        %957 = vmatprep.subr.bf16.mxu0 0
        %958 = vmatpush1.bf16.msra.mxu0 %v578
        %959 = vmatprep.subr.bf16.mxu0 0
        %960 = vmatpush1.bf16.msra.mxu0 %v581
        %961 = vmatprep.subr.bf16.mxu0 0
        %962 = vmatpush1.bf16.msra.mxu0 %v584
        %963 = vmatprep.subr.bf16.mxu0 0
        %964 = vmatpush1.bf16.msra.mxu0 %v587
        %965 = vmatprep.subr.bf16.mxu0 0
        %966 = vmatpush1.bf16.msra.mxu0 %v590
        %967 = vmatprep.subr.bf16.mxu0 0
        %968 = vmatpush1.bf16.msra.mxu0 %v593
        %969 = vmatprep.subr.bf16.mxu0 0
        %970 = vmatpush1.bf16.msra.mxu0 %v596
        %971 = vmatprep.subr.bf16.mxu0 0
        %972 = vmatpush1.bf16.msra.mxu0 %v599
        %973 = vmatprep.subr.bf16.mxu0 0
        %974 = vmatpush1.bf16.msra.mxu0 %v602
        %975 = vmatprep.mubr.bf16.mxu0 %v304
        %976 = vmatmul.mubr.bf16.gmra.mrb[0].mxu0 %v303
        %v977 = vpop.f32.mrb[0].mxu0
        %v978 = vadd.f32 %v856, %v977
        %v979 = vpop.f32.mrb[0].mxu0
        %v980 = vpop.f32.mrb[0].mxu0
        %v981 = vpop.f32.mrb[0].mxu0
        %982 = vdwg.mxu0
        %983 = vmatprep.subr.bf16.mxu0 0
        %984 = vmatpush1.bf16.msra.mxu0 %v605
        %985 = vmatprep.subr.bf16.mxu0 0
        %986 = vmatpush1.bf16.msra.mxu0 %v608
        %987 = vmatprep.subr.bf16.mxu0 0
        %988 = vmatpush1.bf16.msra.mxu0 %v611
        %989 = vmatprep.subr.bf16.mxu0 0
        %990 = vmatpush1.bf16.msra.mxu0 %v614
        %991 = vmatprep.subr.bf16.mxu0 0
        %992 = vmatpush1.bf16.msra.mxu0 %v617
        %993 = vmatprep.subr.bf16.mxu0 0
        %994 = vmatpush1.bf16.msra.mxu0 %v620
        %995 = vmatprep.subr.bf16.mxu0 0
        %996 = vmatpush1.bf16.msra.mxu0 %v623
        %997 = vmatprep.subr.bf16.mxu0 0
        %998 = vmatpush1.bf16.msra.mxu0 %v626
        %999 = vmatprep.subr.bf16.mxu0 0
        %1000 = vmatpush1.bf16.msra.mxu0 0
        %1001 = vmatprep.subr.bf16.mxu0 0
        %1002 = vmatpush1.bf16.msra.mxu0 0
        %1003 = vmatprep.subr.bf16.mxu0 0
        %1004 = vmatpush1.bf16.msra.mxu0 0
        %1005 = vmatprep.subr.bf16.mxu0 0
        %1006 = vmatpush1.bf16.msra.mxu0 0
        %1007 = vmatprep.subr.bf16.mxu0 0
        %1008 = vmatpush1.bf16.msra.mxu0 0
        %1009 = vmatprep.subr.bf16.mxu0 0
        %1010 = vmatpush1.bf16.msra.mxu0 0
        %1011 = vmatprep.subr.bf16.mxu0 0
        %1012 = vmatpush1.bf16.msra.mxu0 0
        %1013 = vmatprep.subr.bf16.mxu0 0
        %1014 = vmatpush1.bf16.msra.mxu0 0
        %1015 = vmatprep.mubr.bf16.mxu0 0
        %1016 = vmatmul.mubr.bf16.gmra.mrb[0].mxu0 %v305
        %v1017 = vpop.f32.mrb[0].mxu0
        %v1018 = vadd.f32 %v978, %v1017
        %v1019 = vpop.f32.mrb[0].mxu0
        %v1020 = vpop.f32.mrb[0].mxu0
        %v1021 = vpop.f32.mrb[0].mxu0
        %1022 = vdwg.mxu0
        %v1023 = vmul.f32 %v937, 0.020833334
        %v1024 = vmul.f32 %v939, 0.020833334
        %v1025 = vmul.f32 %v1018, 0.020833334
        %v1026 = vsub.f32 %v203, %v1023
        %v1027 = vsub.f32 %v204, %v1024
        %v1028 = vsub.f32 %v205, %v1025
        %v1029 = vmul.f32 %v1026, %v1026
        %v1030 = vmul.f32 %v1027, %v1027
        %v1031 = vmul.f32 %v1028, %v1028
        %v1032 = vpack.c.bf16 %v1029, %v1029
        %v1033 = vpack.c.bf16 %v1030, %v1030
        %v1034 = vpack.c.bf16 %v1031, %v1031
        %v1035 = vunpack.c.l.bf16 %v1032
        %v1036 = vunpack.c.l.bf16 %v1033
        %v1037 = vunpack.c.l.bf16 %v1034
        %v1038 = vsub.f32 %v1029, %v1035
        %v1039 = vsub.f32 %v1030, %v1036
        %v1040 = vsub.f32 %v1031, %v1037
        %v1041 = vpack.c.bf16 %v1038, %v1038
        %v1042 = vpack.c.bf16 %v1039, %v1039
        %v1043 = vpack.c.bf16 %v1040, %v1040
        %1044 = vmatprep.subr.bf16.mxu0 %v556
        %1045 = vmatpush1.bf16.msra.mxu0 %v555
        %1046 = vmatprep.subr.bf16.mxu0 %v559
        %1047 = vmatpush1.bf16.msra.mxu0 %v558
        %1048 = vmatprep.subr.bf16.mxu0 %v562
        %1049 = vmatpush1.bf16.msra.mxu0 %v561
        %1050 = vmatprep.subr.bf16.mxu0 %v565
        %1051 = vmatpush1.bf16.msra.mxu0 %v564
        %1052 = vmatprep.subr.bf16.mxu0 %v568
        %1053 = vmatpush1.bf16.msra.mxu0 %v567
        %1054 = vmatprep.subr.bf16.mxu0 %v571
        %1055 = vmatpush1.bf16.msra.mxu0 %v570
        %1056 = vmatprep.subr.bf16.mxu0 %v574
        %1057 = vmatpush1.bf16.msra.mxu0 %v573
        %1058 = vmatprep.subr.bf16.mxu0 %v577
        %1059 = vmatpush1.bf16.msra.mxu0 %v576
        %1060 = vmatprep.subr.bf16.mxu0 %v580
        %1061 = vmatpush1.bf16.msra.mxu0 %v579
        %1062 = vmatprep.subr.bf16.mxu0 %v583
        %1063 = vmatpush1.bf16.msra.mxu0 %v582
        %1064 = vmatprep.subr.bf16.mxu0 %v586
        %1065 = vmatpush1.bf16.msra.mxu0 %v585
        %1066 = vmatprep.subr.bf16.mxu0 %v589
        %1067 = vmatpush1.bf16.msra.mxu0 %v588
        %1068 = vmatprep.subr.bf16.mxu0 %v592
        %1069 = vmatpush1.bf16.msra.mxu0 %v591
        %1070 = vmatprep.subr.bf16.mxu0 %v595
        %1071 = vmatpush1.bf16.msra.mxu0 %v594
        %1072 = vmatprep.subr.bf16.mxu0 %v598
        %1073 = vmatpush1.bf16.msra.mxu0 %v597
        %1074 = vmatprep.subr.bf16.mxu0 %v601
        %1075 = vmatpush1.bf16.msra.mxu0 %v600
        %1076 = vmatprep.mubr.bf16.mxu0 %v1042
        %1077 = vmatmul.mubr.bf16.gmra.mrb[0].mxu0 %v1041
        %v1078 = vpop.f32.mrb[0].mxu0
        %v1079 = vadd.f32 0.0, %v1078
        %v1080 = vpop.f32.mrb[0].mxu0
        %v1081 = vadd.f32 0.0, %v1080
        %v1082 = vpop.f32.mrb[0].mxu0
        %v1083 = vpop.f32.mrb[0].mxu0
        %1084 = vdwg.mxu0
        %1085 = vmatprep.subr.bf16.mxu0 %v604
        %1086 = vmatpush1.bf16.msra.mxu0 %v603
        %1087 = vmatprep.subr.bf16.mxu0 %v607
        %1088 = vmatpush1.bf16.msra.mxu0 %v606
        %1089 = vmatprep.subr.bf16.mxu0 %v610
        %1090 = vmatpush1.bf16.msra.mxu0 %v609
        %1091 = vmatprep.subr.bf16.mxu0 %v613
        %1092 = vmatpush1.bf16.msra.mxu0 %v612
        %1093 = vmatprep.subr.bf16.mxu0 %v616
        %1094 = vmatpush1.bf16.msra.mxu0 %v615
        %1095 = vmatprep.subr.bf16.mxu0 %v619
        %1096 = vmatpush1.bf16.msra.mxu0 %v618
        %1097 = vmatprep.subr.bf16.mxu0 %v622
        %1098 = vmatpush1.bf16.msra.mxu0 %v621
        %1099 = vmatprep.subr.bf16.mxu0 %v625
        %1100 = vmatpush1.bf16.msra.mxu0 %v624
        %1101 = vmatprep.subr.bf16.mxu0 0
        %1102 = vmatpush1.bf16.msra.mxu0 0
        %1103 = vmatprep.subr.bf16.mxu0 0
        %1104 = vmatpush1.bf16.msra.mxu0 0
        %1105 = vmatprep.subr.bf16.mxu0 0
        %1106 = vmatpush1.bf16.msra.mxu0 0
        %1107 = vmatprep.subr.bf16.mxu0 0
        %1108 = vmatpush1.bf16.msra.mxu0 0
        %1109 = vmatprep.subr.bf16.mxu0 0
        %1110 = vmatpush1.bf16.msra.mxu0 0
        %1111 = vmatprep.subr.bf16.mxu0 0
        %1112 = vmatpush1.bf16.msra.mxu0 0
        %1113 = vmatprep.subr.bf16.mxu0 0
        %1114 = vmatpush1.bf16.msra.mxu0 0
        %1115 = vmatprep.subr.bf16.mxu0 0
        %1116 = vmatpush1.bf16.msra.mxu0 0
        %1117 = vmatprep.mubr.bf16.mxu0 0
        %1118 = vmatmul.mubr.bf16.gmra.mrb[0].mxu0 %v1043
        %v1119 = vpop.f32.mrb[0].mxu0
        %v1120 = vadd.f32 %v1079, %v1119
        %v1121 = vpop.f32.mrb[0].mxu0
        %v1122 = vadd.f32 %v1081, %v1121
        %v1123 = vpop.f32.mrb[0].mxu0
        %v1124 = vpop.f32.mrb[0].mxu0
        %1125 = vdwg.mxu0
        %1126 = vmatprep.subr.bf16.mxu0 0
        %1127 = vmatpush1.bf16.msra.mxu0 %v557
        %1128 = vmatprep.subr.bf16.mxu0 0
        %1129 = vmatpush1.bf16.msra.mxu0 %v560
        %1130 = vmatprep.subr.bf16.mxu0 0
        %1131 = vmatpush1.bf16.msra.mxu0 %v563
        %1132 = vmatprep.subr.bf16.mxu0 0
        %1133 = vmatpush1.bf16.msra.mxu0 %v566
        %1134 = vmatprep.subr.bf16.mxu0 0
        %1135 = vmatpush1.bf16.msra.mxu0 %v569
        %1136 = vmatprep.subr.bf16.mxu0 0
        %1137 = vmatpush1.bf16.msra.mxu0 %v572
        %1138 = vmatprep.subr.bf16.mxu0 0
        %1139 = vmatpush1.bf16.msra.mxu0 %v575
        %1140 = vmatprep.subr.bf16.mxu0 0
        %1141 = vmatpush1.bf16.msra.mxu0 %v578
        %1142 = vmatprep.subr.bf16.mxu0 0
        %1143 = vmatpush1.bf16.msra.mxu0 %v581
        %1144 = vmatprep.subr.bf16.mxu0 0
        %1145 = vmatpush1.bf16.msra.mxu0 %v584
        %1146 = vmatprep.subr.bf16.mxu0 0
        %1147 = vmatpush1.bf16.msra.mxu0 %v587
        %1148 = vmatprep.subr.bf16.mxu0 0
        %1149 = vmatpush1.bf16.msra.mxu0 %v590
        %1150 = vmatprep.subr.bf16.mxu0 0
        %1151 = vmatpush1.bf16.msra.mxu0 %v593
        %1152 = vmatprep.subr.bf16.mxu0 0
        %1153 = vmatpush1.bf16.msra.mxu0 %v596
        %1154 = vmatprep.subr.bf16.mxu0 0
        %1155 = vmatpush1.bf16.msra.mxu0 %v599
        %1156 = vmatprep.subr.bf16.mxu0 0
        %1157 = vmatpush1.bf16.msra.mxu0 %v602
        %1158 = vmatprep.mubr.bf16.mxu0 %v1042
        %1159 = vmatmul.mubr.bf16.gmra.mrb[0].mxu0 %v1041
        %v1160 = vpop.f32.mrb[0].mxu0
        %v1161 = vadd.f32 0.0, %v1160
        %v1162 = vpop.f32.mrb[0].mxu0
        %v1163 = vpop.f32.mrb[0].mxu0
        %v1164 = vpop.f32.mrb[0].mxu0
        %1165 = vdwg.mxu0
        %1166 = vmatprep.subr.bf16.mxu0 0
        %1167 = vmatpush1.bf16.msra.mxu0 %v605
        %1168 = vmatprep.subr.bf16.mxu0 0
        %1169 = vmatpush1.bf16.msra.mxu0 %v608
        %1170 = vmatprep.subr.bf16.mxu0 0
        %1171 = vmatpush1.bf16.msra.mxu0 %v611
        %1172 = vmatprep.subr.bf16.mxu0 0
        %1173 = vmatpush1.bf16.msra.mxu0 %v614
        %1174 = vmatprep.subr.bf16.mxu0 0
        %1175 = vmatpush1.bf16.msra.mxu0 %v617
        %1176 = vmatprep.subr.bf16.mxu0 0
        %1177 = vmatpush1.bf16.msra.mxu0 %v620
        %1178 = vmatprep.subr.bf16.mxu0 0
        %1179 = vmatpush1.bf16.msra.mxu0 %v623
        %1180 = vmatprep.subr.bf16.mxu0 0
        %1181 = vmatpush1.bf16.msra.mxu0 %v626
        %1182 = vmatprep.subr.bf16.mxu0 0
        %1183 = vmatpush1.bf16.msra.mxu0 0
        %1184 = vmatprep.subr.bf16.mxu0 0
        %1185 = vmatpush1.bf16.msra.mxu0 0
        %1186 = vmatprep.subr.bf16.mxu0 0
        %1187 = vmatpush1.bf16.msra.mxu0 0
        %1188 = vmatprep.subr.bf16.mxu0 0
        %1189 = vmatpush1.bf16.msra.mxu0 0
        %1190 = vmatprep.subr.bf16.mxu0 0
        %1191 = vmatpush1.bf16.msra.mxu0 0
        %1192 = vmatprep.subr.bf16.mxu0 0
        %1193 = vmatpush1.bf16.msra.mxu0 0
        %1194 = vmatprep.subr.bf16.mxu0 0
        %1195 = vmatpush1.bf16.msra.mxu0 0
        %1196 = vmatprep.subr.bf16.mxu0 0
        %1197 = vmatpush1.bf16.msra.mxu0 0
        %1198 = vmatprep.mubr.bf16.mxu0 0
        %1199 = vmatmul.mubr.bf16.gmra.mrb[0].mxu0 %v1043
        %v1200 = vpop.f32.mrb[0].mxu0
        %v1201 = vadd.f32 %v1161, %v1200
        %v1202 = vpop.f32.mrb[0].mxu0
        %v1203 = vpop.f32.mrb[0].mxu0
        %v1204 = vpop.f32.mrb[0].mxu0
        %1205 = vdwg.mxu0
        %1206 = vmatprep.subr.bf16.mxu0 %v556
        %1207 = vmatpush1.bf16.msra.mxu0 %v555
        %1208 = vmatprep.subr.bf16.mxu0 %v559
        %1209 = vmatpush1.bf16.msra.mxu0 %v558
        %1210 = vmatprep.subr.bf16.mxu0 %v562
        %1211 = vmatpush1.bf16.msra.mxu0 %v561
        %1212 = vmatprep.subr.bf16.mxu0 %v565
        %1213 = vmatpush1.bf16.msra.mxu0 %v564
        %1214 = vmatprep.subr.bf16.mxu0 %v568
        %1215 = vmatpush1.bf16.msra.mxu0 %v567
        %1216 = vmatprep.subr.bf16.mxu0 %v571
        %1217 = vmatpush1.bf16.msra.mxu0 %v570
        %1218 = vmatprep.subr.bf16.mxu0 %v574
        %1219 = vmatpush1.bf16.msra.mxu0 %v573
        %1220 = vmatprep.subr.bf16.mxu0 %v577
        %1221 = vmatpush1.bf16.msra.mxu0 %v576
        %1222 = vmatprep.subr.bf16.mxu0 %v580
        %1223 = vmatpush1.bf16.msra.mxu0 %v579
        %1224 = vmatprep.subr.bf16.mxu0 %v583
        %1225 = vmatpush1.bf16.msra.mxu0 %v582
        %1226 = vmatprep.subr.bf16.mxu0 %v586
        %1227 = vmatpush1.bf16.msra.mxu0 %v585
        %1228 = vmatprep.subr.bf16.mxu0 %v589
        %1229 = vmatpush1.bf16.msra.mxu0 %v588
        %1230 = vmatprep.subr.bf16.mxu0 %v592
        %1231 = vmatpush1.bf16.msra.mxu0 %v591
        %1232 = vmatprep.subr.bf16.mxu0 %v595
        %1233 = vmatpush1.bf16.msra.mxu0 %v594
        %1234 = vmatprep.subr.bf16.mxu0 %v598
        %1235 = vmatpush1.bf16.msra.mxu0 %v597
        %1236 = vmatprep.subr.bf16.mxu0 %v601
        %1237 = vmatpush1.bf16.msra.mxu0 %v600
        %1238 = vmatprep.mubr.bf16.mxu0 %v1033
        %1239 = vmatmul.mubr.bf16.gmra.mrb[0].mxu0 %v1032
        %v1240 = vpop.f32.mrb[0].mxu0
        %v1241 = vadd.f32 %v1120, %v1240
        %v1242 = vpop.f32.mrb[0].mxu0
        %v1243 = vadd.f32 %v1122, %v1242
        %v1244 = vpop.f32.mrb[0].mxu0
        %v1245 = vpop.f32.mrb[0].mxu0
        %1246 = vdwg.mxu0
        %1247 = vmatprep.subr.bf16.mxu0 %v604
        %1248 = vmatpush1.bf16.msra.mxu0 %v603
        %1249 = vmatprep.subr.bf16.mxu0 %v607
        %1250 = vmatpush1.bf16.msra.mxu0 %v606
        %1251 = vmatprep.subr.bf16.mxu0 %v610
        %1252 = vmatpush1.bf16.msra.mxu0 %v609
        %1253 = vmatprep.subr.bf16.mxu0 %v613
        %1254 = vmatpush1.bf16.msra.mxu0 %v612
        %1255 = vmatprep.subr.bf16.mxu0 %v616
        %1256 = vmatpush1.bf16.msra.mxu0 %v615
        %1257 = vmatprep.subr.bf16.mxu0 %v619
        %1258 = vmatpush1.bf16.msra.mxu0 %v618
        %1259 = vmatprep.subr.bf16.mxu0 %v622
        %1260 = vmatpush1.bf16.msra.mxu0 %v621
        %1261 = vmatprep.subr.bf16.mxu0 %v625
        %1262 = vmatpush1.bf16.msra.mxu0 %v624
        %1263 = vmatprep.subr.bf16.mxu0 0
        %1264 = vmatpush1.bf16.msra.mxu0 0
        %1265 = vmatprep.subr.bf16.mxu0 0
        %1266 = vmatpush1.bf16.msra.mxu0 0
        %1267 = vmatprep.subr.bf16.mxu0 0
        %1268 = vmatpush1.bf16.msra.mxu0 0
        %1269 = vmatprep.subr.bf16.mxu0 0
        %1270 = vmatpush1.bf16.msra.mxu0 0
        %1271 = vmatprep.subr.bf16.mxu0 0
        %1272 = vmatpush1.bf16.msra.mxu0 0
        %1273 = vmatprep.subr.bf16.mxu0 0
        %1274 = vmatpush1.bf16.msra.mxu0 0
        %1275 = vmatprep.subr.bf16.mxu0 0
        %1276 = vmatpush1.bf16.msra.mxu0 0
        %1277 = vmatprep.subr.bf16.mxu0 0
        %1278 = vmatpush1.bf16.msra.mxu0 0
        %1279 = vmatprep.mubr.bf16.mxu0 0
        %1280 = vmatmul.mubr.bf16.gmra.mrb[0].mxu0 %v1034
        %v1281 = vpop.f32.mrb[0].mxu0
        %v1282 = vadd.f32 %v1241, %v1281
        %v1283 = vpop.f32.mrb[0].mxu0
        %v1284 = vadd.f32 %v1243, %v1283
        %v1285 = vpop.f32.mrb[0].mxu0
        %v1286 = vpop.f32.mrb[0].mxu0
        %1287 = vdwg.mxu0
        %1288 = vmatprep.subr.bf16.mxu0 0
        %1289 = vmatpush1.bf16.msra.mxu0 %v557
        %1290 = vmatprep.subr.bf16.mxu0 0
        %1291 = vmatpush1.bf16.msra.mxu0 %v560
        %1292 = vmatprep.subr.bf16.mxu0 0
        %1293 = vmatpush1.bf16.msra.mxu0 %v563
        %1294 = vmatprep.subr.bf16.mxu0 0
        %1295 = vmatpush1.bf16.msra.mxu0 %v566
        %1296 = vmatprep.subr.bf16.mxu0 0
        %1297 = vmatpush1.bf16.msra.mxu0 %v569
        %1298 = vmatprep.subr.bf16.mxu0 0
        %1299 = vmatpush1.bf16.msra.mxu0 %v572
        %1300 = vmatprep.subr.bf16.mxu0 0
        %1301 = vmatpush1.bf16.msra.mxu0 %v575
        %1302 = vmatprep.subr.bf16.mxu0 0
        %1303 = vmatpush1.bf16.msra.mxu0 %v578
        %1304 = vmatprep.subr.bf16.mxu0 0
        %1305 = vmatpush1.bf16.msra.mxu0 %v581
        %1306 = vmatprep.subr.bf16.mxu0 0
        %1307 = vmatpush1.bf16.msra.mxu0 %v584
        %1308 = vmatprep.subr.bf16.mxu0 0
        %1309 = vmatpush1.bf16.msra.mxu0 %v587
        %1310 = vmatprep.subr.bf16.mxu0 0
        %1311 = vmatpush1.bf16.msra.mxu0 %v590
        %1312 = vmatprep.subr.bf16.mxu0 0
        %1313 = vmatpush1.bf16.msra.mxu0 %v593
        %1314 = vmatprep.subr.bf16.mxu0 0
        %1315 = vmatpush1.bf16.msra.mxu0 %v596
        %1316 = vmatprep.subr.bf16.mxu0 0
        %1317 = vmatpush1.bf16.msra.mxu0 %v599
        %1318 = vmatprep.subr.bf16.mxu0 0
        %1319 = vmatpush1.bf16.msra.mxu0 %v602
        %1320 = vmatprep.mubr.bf16.mxu0 %v1033
        %1321 = vmatmul.mubr.bf16.gmra.mrb[0].mxu0 %v1032
        %v1322 = vpop.f32.mrb[0].mxu0
        %v1323 = vadd.f32 %v1201, %v1322
        %v1324 = vpop.f32.mrb[0].mxu0
        %v1325 = vpop.f32.mrb[0].mxu0
        %v1326 = vpop.f32.mrb[0].mxu0
        %1327 = vdwg.mxu0
        %1328 = vmatprep.subr.bf16.mxu0 0
        %1329 = vmatpush1.bf16.msra.mxu0 %v605
        %1330 = vmatprep.subr.bf16.mxu0 0
        %1331 = vmatpush1.bf16.msra.mxu0 %v608
        %1332 = vmatprep.subr.bf16.mxu0 0
        %1333 = vmatpush1.bf16.msra.mxu0 %v611
        %1334 = vmatprep.subr.bf16.mxu0 0
        %1335 = vmatpush1.bf16.msra.mxu0 %v614
        %1336 = vmatprep.subr.bf16.mxu0 0
        %1337 = vmatpush1.bf16.msra.mxu0 %v617
        %1338 = vmatprep.subr.bf16.mxu0 0
        %1339 = vmatpush1.bf16.msra.mxu0 %v620
        %1340 = vmatprep.subr.bf16.mxu0 0
        %1341 = vmatpush1.bf16.msra.mxu0 %v623
        %1342 = vmatprep.subr.bf16.mxu0 0
        %1343 = vmatpush1.bf16.msra.mxu0 %v626
        %1344 = vmatprep.subr.bf16.mxu0 0
        %1345 = vmatpush1.bf16.msra.mxu0 0
        %1346 = vmatprep.subr.bf16.mxu0 0
        %1347 = vmatpush1.bf16.msra.mxu0 0
        %1348 = vmatprep.subr.bf16.mxu0 0
        %1349 = vmatpush1.bf16.msra.mxu0 0
        %1350 = vmatprep.subr.bf16.mxu0 0
        %1351 = vmatpush1.bf16.msra.mxu0 0
        %1352 = vmatprep.subr.bf16.mxu0 0
        %1353 = vmatpush1.bf16.msra.mxu0 0
        %1354 = vmatprep.subr.bf16.mxu0 0
        %1355 = vmatpush1.bf16.msra.mxu0 0
        %1356 = vmatprep.subr.bf16.mxu0 0
        %1357 = vmatpush1.bf16.msra.mxu0 0
        %1358 = vmatprep.subr.bf16.mxu0 0
        %1359 = vmatpush1.bf16.msra.mxu0 0
        %1360 = vmatprep.mubr.bf16.mxu0 0
        %1361 = vmatmul.mubr.bf16.gmra.mrb[0].mxu0 %v1034
        %v1362 = vpop.f32.mrb[0].mxu0
        %v1363 = vadd.f32 %v1323, %v1362
        %v1364 = vpop.f32.mrb[0].mxu0
        %v1365 = vpop.f32.mrb[0].mxu0
        %v1366 = vpop.f32.mrb[0].mxu0
        %1367 = vdwg.mxu0
        %v1368 = vmul.f32 %v1282, 0.020833334
        %v1369 = vmul.f32 %v1284, 0.020833334
        %v1370 = vmul.f32 %v1363, 0.020833334
        %v1371 = vadd.f32 %v1368, 1e-05
        %v1372 = vadd.f32 %v1369, 1e-05
        %v1373 = vadd.f32 %v1370, 1e-05
        %v1374 = vrsqrt.pop %v1371
        %v1375 = vrsqrt.pop %v1372
        %v1376 = vrsqrt.pop %v1373
        %v1377 = vmul.f32 %v203, %v1374
        %v1378 = vmul.f32 %v204, %v1375
        %v1379 = vmul.f32 %v205, %v1376
        %v1381 = vlaneseq
        %v1382 = vshrl.u32 %v1381, 7
        %v1383 = vsub.s32 0, %v1382
        %v1384 = vrot.slane %v206, %v1383
        %v1385 = vlaneseq
        %v1386 = vshrl.u32 %v1385, 7
        %v1387 = vsub.s32 1, %v1386
        %v1388 = vrot.slane %v206, %v1387
        %v1389 = vlaneseq
        %v1390 = vshrl.u32 %v1389, 7
        %v1391 = vsub.s32 2, %v1390
        %v1392 = vrot.slane %v206, %v1391
        %v1396 = vmul.f32 %v1377, %v1384
        %v1397 = vmul.f32 %v1378, %v1388
        %v1398 = vmul.f32 %v1379, %v1392
        %1399 = vst [vmem:[%s201] sm:$0xff] %v1396
        %1400 = vst [vmem:[%s201 + $0x8] sm:$0xff] %v1397
        %1401 = vst [vmem:[%s201 + $0x10] sm:$0xff] %v1398
        %s1402 = sand.u32 %s97, 1
        %s1403 = scalar_lea.sflag [#allocation4], %s1402
        %s1404 = sand.u32 %s97, 1
        %s1405 = smul.addr %s1404, 24
        %s1406 = scalar_lea.vmem [#allocation7], %s1405
        // Predicated region
        $region41: #{tpu_custom_call.1} parent=31 // pred_check
          %p1407 = pneg %p107
        $region42: #{tpu_custom_call.1} parent=31 // pred_check_branch
          %1409 = sbr.rel (%p1407) target = $region44
        $region43: #{tpu_custom_call.1} parent=31 // pred_region
          %s1411 = ssub.s32 384, 384
          %1412 = vsyncadd %s1403, %s1411
          %s1413 = smul.addr %s21, 3
          %s1414 = smul.addr %s1413, 128
          %s1415 = scalar_lea.hbm %s3, %s1414
          %s1417 = sshll.u32 %s1406, 4
          %s1418 = int_to_ptr.vmem [resolvable:$true] %s1417
          %1420 = dma.vmem_to_hbm [thread:$0]  %s1418, 384, %s1415, %s1403
        $region44: #{tpu_custom_call.1} parent=31 // pred_fallthru
          _
      $region32: #{tpu_custom_call.1} parent=5 // pred_fallthru
        _
      %p1421 = scmp.le.s32.totalorder 2, %s16
      // Predicated region
      $region45: #{tpu_custom_call.1} parent=5 // pred_check
        %p1422 = pneg %p1421
      $region46: #{tpu_custom_call.1} parent=5 // pred_check_branch
        %1424 = sbr.rel (%p1422) target = $region48
      $region47: #{tpu_custom_call.1} parent=5 // pred_region
        %s1425 = ssub.s32 %s16, 2
        // Predicated region
        $region49: #{tpu_custom_call.1} parent=47 // pred_check
          %p1426 = pneg %p113
        $region50: #{tpu_custom_call.1} parent=47 // pred_check_branch
          %1428 = sbr.rel (%p1426) target = $region52
        $region51: #{tpu_custom_call.1} parent=47 // pred_region
          %s1429 = sand.u32 %s98, 1
          %s1430 = scalar_lea.sflag [#allocation4], %s1429
          %s1431 = sand.u32 %s98, 1
          %s1432 = smul.addr %s1431, 24
          %s1433 = scalar_lea.vmem [#allocation7], %s1432
          %1434 = dma.done %s1430, 384
        $region52: #{tpu_custom_call.1} parent=47 // pred_fallthru
          _
      $region48: #{tpu_custom_call.1} parent=5 // pred_fallthru
        _
    $region6: #{tpu_custom_call.1} parent=1 // loop_footer
      %s20 = sadd.s32 1, %s16
    $region7: #{tpu_custom_call.1} parent=1 // loop_footer_branch
      %15 = sbr.rel target = $region3
    $region8: #{tpu_custom_call.1} parent=1 // loop_exit
      _
    %1435 = vsyncpa [#allocation3], 1
    %s1436 = scalar_lea.sflag [#allocation3], 1
    %1437 = vsyncpa %s1436, 1
    %1438 = vsyncpa [#allocation6], 1
    %1439 = vsyncpa [#allocation4], 1
    %s1440 = scalar_lea.sflag [#allocation4], 1
    %1441 = vsyncpa %s1440, 1

</llo_original>
